<compile_context>
chip_gen: v7x
topology: tpu7x:2x2x1
jax: 0.10.0
libtpu: 0.0.40
codegen_flags: <defaults>
</compile_context>

<pallas_src>
import jax
import jax.numpy as jnp
from jax.experimental import pallas as pl
from jax.experimental.pallas import tpu as pltpu

LANES = 128
MAX_BLOCK_ROWS = 1024  # 1024 x 128 x f32 = 512 KiB per input block


def _make_mse_kernel(total_rows, block_rows, n_elems, need_row_mask):
    """Build a kernel accumulating sum((x - t)^2); emits mean at the end."""
    inv_n = 1.0 / float(n_elems)

    def kernel(x_ref, t_ref, o_ref, acc_ref):
        i = pl.program_id(0)

        @pl.when(i == 0)
        def _init():
            acc_ref[...] = jnp.zeros_like(acc_ref)

        # Upcast in-register; inputs stream from HBM in their native dtype.
        d = x_ref[...].astype(jnp.float32) - t_ref[...].astype(jnp.float32)
        sq = d * d

        if need_row_mask:
            # Only the last grid step can overhang the array; rows beyond
            # `total_rows` contain unspecified pipeline padding -> zero them.
            row_ids = i * block_rows + jax.lax.broadcasted_iota(
                jnp.int32, (block_rows, LANES), 0
            )
            sq = jnp.where(row_ids < total_rows, sq, 0.0)

        # Pure VPU elementwise accumulate; no per-step cross-lane reduction.
        acc_ref[...] += sq

        @pl.when(i == pl.num_programs(0) - 1)
        def _finalize():
            o_ref[0] = jnp.sum(acc_ref[...]) * jnp.float32(inv_n)

    return kernel


@jax.jit
def _mse_loss_pallas(x, target):
    """mean((x - target)^2) over all elements, computed in a Pallas kernel."""
    assert x.shape == target.shape, (x.shape, target.shape)
    n_elems = x.size

    xf = x.reshape(-1)
    tf = target.reshape(-1)

    # Lane-align only if needed (pad <= 127 elements). Padding both inputs
    # with zeros contributes (0 - 0)^2 = 0 to the sum; mean divides by the
    # true n_elems, so correctness is unaffected.
    rem = n_elems % LANES
    if rem:
        pad = LANES - rem
        xf = jnp.pad(xf, (0, pad))
        tf = jnp.pad(tf, (0, pad))

    rows = xf.shape[0] // LANES
    x2d = xf.reshape(rows, LANES)
    t2d = tf.reshape(rows, LANES)

    # Big streaming block (amortizes per-step overhead); for small inputs the
    # block is simply the whole slab.
    block_rows = rows if rows <= MAX_BLOCK_ROWS else MAX_BLOCK_ROWS
    num_tiles = (rows + block_rows - 1) // block_rows
    need_row_mask = (rows % block_rows) != 0

    kernel = _make_mse_kernel(rows, block_rows, n_elems, need_row_mask)

    in_bytes = n_elems * (x.dtype.itemsize + target.dtype.itemsize)
    cost = pl.CostEstimate(
        flops=3 * n_elems,          # sub, mul, add per element
        transcendentals=0,
        bytes_accessed=in_bytes + 4,
    )

    sq_mean = pl.pallas_call(
        kernel,
        out_shape=jax.ShapeDtypeStruct((1,), jnp.float32),
        grid_spec=pltpu.PrefetchScalarGridSpec(
            num_scalar_prefetch=0,
            grid=(num_tiles,),
            in_specs=[
                pl.BlockSpec((block_rows, LANES), lambda i: (i, 0)),
                pl.BlockSpec((block_rows, LANES), lambda i: (i, 0)),
            ],
            out_specs=pl.BlockSpec(
                (1,), lambda i: (0,), memory_space=pltpu.SMEM
            ),
            scratch_shapes=[pltpu.VMEM((block_rows, LANES), jnp.float32)],
        ),
        compiler_params=pltpu.CompilerParams(
            dimension_semantics=("arbitrary",)
        ),
        cost_estimate=cost,
    )(x2d, t2d)

    return sq_mean[0]


class ContentLoss:
    """JAX/Pallas port of the PyTorch ContentLoss module."""

    def __init__(self, target):
        # .detach() in torch -> stop_gradient in JAX
        self.target = jax.lax.stop_gradient(target)
        self.loss = None

    def __call__(self, x):
        self.loss = _mse_loss_pallas(x, self.target)
        return x  # pass-through, same as the PyTorch forward


if __name__ == "__main__":
    key = jax.random.PRNGKey(0)
    k1, k2, k3, k4 = jax.random.split(key, 4)

    # --- Test 1: small NCHW conv-feature shape, f32, single-block path. ---
    shape = (2, 4, 16, 16)
    target = jax.random.normal(k1, shape, dtype=jnp.float32)
    x = jax.random.normal(k2, shape, dtype=jnp.float32)

    module = ContentLoss(target)
    out = module(x)
    out = jax.block_until_ready(out)
    loss = jax.block_until_ready(module.loss)

    ref = jnp.mean((x - target) ** 2)
    assert jnp.allclose(loss, ref, rtol=1e-5, atol=1e-6), (loss, ref)
    assert out.shape == x.shape and jnp.array_equal(out, x)

    # --- Test 2: bf16, lane-unaligned size, multi-tile + masked tail path. ---
    shape2 = (2, 16, 63, 81)  # 163296 elems: % 128 != 0, rows > MAX_BLOCK_ROWS
    target2 = jax.random.normal(k3, shape2, dtype=jnp.bfloat16)
    x2 = jax.random.normal(k4, shape2, dtype=jnp.bfloat16)

    module2 = ContentLoss(target2)
    out2 = jax.block_until_ready(module2(x2))
    loss2 = jax.block_until_ready(module2.loss)

    ref2 = jnp.mean(
        (x2.astype(jnp.float32) - target2.astype(jnp.float32)) ** 2
    )
    assert jnp.allclose(loss2, ref2, rtol=1e-4, atol=1e-6), (loss2, ref2)
    assert jnp.array_equal(out2, x2)

    print("KERNEL_OK")
</pallas_src>

<mosaic_0001>
module attributes {stable_mosaic.version = 11 : i64} {
  func.func @kernel(%arg0: i32, %arg1: memref<16x128xf32, #tpu.memory_space<vmem>>, %arg2: memref<16x128xf32, #tpu.memory_space<vmem>>, %arg3: memref<1xf32, #tpu.memory_space<smem>>, %arg4: memref<16x128xf32, #tpu.memory_space<vmem>>) attributes {dimension_semantics = [#tpu.dimension_semantics<arbitrary>], iteration_bounds = array<i64: 1>, scalar_prefetch = 0 : i64, scratch_operands = 1 : i64, tpu.core_type = #tpu.core_type<tc>, window_params = [{transform_indices = @transform_0, window_bounds = array<i64: 16, 128>}, {transform_indices = @transform_1, window_bounds = array<i64: 16, 128>}, {transform_indices = @transform_2, window_bounds = array<i64: 1>}]} {
    %c0_i32 = arith.constant 0 : i32
    %0 = arith.cmpi eq, %arg0, %c0_i32 : i32
    %1 = arith.extui %0 : i1 to i32
    %c0_i32_0 = arith.constant 0 : i32
    %2 = arith.cmpi ne, %1, %c0_i32_0 : i32
    scf.if %2 {
      %cst = arith.constant 0.000000e+00 : f32
      %13 = vector.broadcast %cst : f32 to vector<16x128xf32>
      %c0_10 = arith.constant 0 : index
      %c0_11 = arith.constant 0 : index
      %14 = vector.load %arg4[%c0_10, %c0_11] : memref<16x128xf32, #tpu.memory_space<vmem>>, vector<16x128xf32>
      tpu.vector_store %arg4[%c0_10, %c0_11], %13 {strides = array<i32>} : memref<16x128xf32, #tpu.memory_space<vmem>>, vector<16x128xf32>,
    } else {
    }
    %c0 = arith.constant 0 : index
    %c0_1 = arith.constant 0 : index
    %3 = vector.load %arg1[%c0, %c0_1] : memref<16x128xf32, #tpu.memory_space<vmem>>, vector<16x128xf32>
    %c0_2 = arith.constant 0 : index
    %c0_3 = arith.constant 0 : index
    %4 = vector.load %arg2[%c0_2, %c0_3] : memref<16x128xf32, #tpu.memory_space<vmem>>, vector<16x128xf32>
    %5 = arith.subf %3, %4 : vector<16x128xf32>
    %6 = arith.mulf %5, %5 : vector<16x128xf32>
    %c0_4 = arith.constant 0 : index
    %c0_5 = arith.constant 0 : index
    %7 = vector.load %arg4[%c0_4, %c0_5] : memref<16x128xf32, #tpu.memory_space<vmem>>, vector<16x128xf32>
    %8 = arith.addf %7, %6 : vector<16x128xf32>
    %c0_6 = arith.constant 0 : index
    %c0_7 = arith.constant 0 : index
    %9 = vector.load %arg4[%c0_6, %c0_7] : memref<16x128xf32, #tpu.memory_space<vmem>>, vector<16x128xf32>
    tpu.vector_store %arg4[%c0_6, %c0_7], %8 {strides = array<i32>} : memref<16x128xf32, #tpu.memory_space<vmem>>, vector<16x128xf32>,
    %c0_i32_8 = arith.constant 0 : i32
    %10 = arith.cmpi eq, %arg0, %c0_i32_8 : i32
    %11 = arith.extui %10 : i1 to i32
    %c0_i32_9 = arith.constant 0 : i32
    %12 = arith.cmpi ne, %11, %c0_i32_9 : i32
    scf.if %12 {
      %c0_10 = arith.constant 0 : index
      %c0_11 = arith.constant 0 : index
      %13 = vector.load %arg4[%c0_10, %c0_11] : memref<16x128xf32, #tpu.memory_space<vmem>>, vector<16x128xf32>
      %14 = vector.shape_cast %13 : vector<16x128xf32> to vector<1x16x128xf32>
      %cst = arith.constant dense<0.000000e+00> : vector<1xf32>
      %15 = vector.multi_reduction <add>, %14, %cst [1, 2] : vector<1x16x128xf32> to vector<1xf32>
      %16 = vector.shape_cast %15 : vector<1xf32> to vector<1x1x1xf32>
      %17 = vector.extract %16[0, 0, 0] : f32 from vector<1x1x1xf32>
      %cst_12 = arith.constant 4.8828125E-4 : f32
      %18 = arith.mulf %17, %cst_12 : f32
      %c0_13 = arith.constant 0 : index
      %19 = memref.load %arg3[%c0_13] : memref<1xf32, #tpu.memory_space<smem>>
      memref.store %18, %arg3[%c0_13] : memref<1xf32, #tpu.memory_space<smem>>
    } else {
    }
    return
  }
  func.func @transform_0(%arg0: i32) -> (i32, i32) {
    %c0_i32 = arith.constant 0 : i32
    %c0_i32_0 = arith.constant 0 : i32
    return %arg0, %c0_i32 : i32, i32
  }
  func.func @transform_1(%arg0: i32) -> (i32, i32) {
    %c0_i32 = arith.constant 0 : i32
    %c0_i32_0 = arith.constant 0 : i32
    return %arg0, %c0_i32 : i32, i32
  }
  func.func @transform_2(%arg0: i32) -> i32 {
    %c0_i32 = arith.constant 0 : i32
    %c0_i32_0 = arith.constant 0 : i32
    return %c0_i32 : i32
  }
}

</mosaic_0001>

<llo_original>
// kernel: _mse_loss_pallas.1
$region0: #{_mse_loss_pallas.1}
  #allocation0 [shape = 'u32[]', space=smem, size = 0x4, offset = 0x4, fixed_abs, tag = 'smem constant byte address 0x4 - core index']
  #allocation1 [shape = 'u32[144,128]{1,0:T(1,128)}', space=vmem, size = 0x12000, scoped, tag = 'internal scratch']
  #allocation2 [shape = 'f32[16,128]{1,0:T(8,128)}', space=vmem, size = 0x2000, scoped, tag = 'scratch operand']
  %s0 = inlined_call_operand.vmem [shape: f32[16,128], index: 0, kind: input, shape index: {}]
  %s1 = inlined_call_operand.vmem [shape: f32[16,128], index: 1, kind: input, shape index: {}]
  %s2 = inlined_call_operand.hbm [shape: f32[1], index: 2, kind: output, shape index: {}]
  %s3 = sld [smem:[#allocation0]]
  $region26: #{_mse_loss_pallas.1} parent=0
    _
  %s5 = ssub.s32 1, %s3
  %s6 = scalar_select 0, %s5, %s3
  $region1: #{_mse_loss_pallas.1} parent=0
    #allocation3 [shape = 'u8[512]{0}', space=smem, size = 0x200, scoped, tag = 'output window, operand 0, single buffered']
    #allocation4 [shape = 's32[1]{0}', space=sflag, size = 0x4, scoped, tag = 'scoped memory for _mse_loss_pallas.1']
    %7 = vsyncpa [#allocation4], 0
    // Predicated region
    $region2: #{_mse_loss_pallas.1} parent=1 // pred_check
      _
    $region3: #{_mse_loss_pallas.1} parent=1 // pred_check_branch
      %9 = sbr.rel (0) target = $region5
    $region4: #{_mse_loss_pallas.1} parent=1 // pred_region
      _
    $region5: #{_mse_loss_pallas.1} parent=1 // pred_fallthru
      _
    // Predicated region
    $region6: #{_mse_loss_pallas.1} parent=1 // pred_check
      _
    $region7: #{_mse_loss_pallas.1} parent=1 // pred_check_branch
      %11 = sbr.rel (0) target = $region9
    $region8: #{_mse_loss_pallas.1} parent=1 // pred_region
      _
    $region9: #{_mse_loss_pallas.1} parent=1 // pred_fallthru
      _
    %p12 = scmp.eq.s32.totalorder 0, 0
    // Predicated region
    $region10: #{_mse_loss_pallas.1} parent=1 // pred_check
      %p13 = pneg %p12
    $region11: #{_mse_loss_pallas.1} parent=1 // pred_check_branch
      %15 = sbr.rel (%p13) target = $region13
    $region12: #{_mse_loss_pallas.1} parent=1 // pred_region
      %16 = vst [vmem:[#allocation2] sm:$0xff] 0.0
      %17 = vst [vmem:[#allocation2 + $0x8] sm:$0xff] 0.0
    $region13: #{_mse_loss_pallas.1} parent=1 // pred_fallthru
      _
    %v18 = vld [vmem:[%s0] sm:$0xff]
    %v19 = vld [vmem:[%s0 + $0x8] sm:$0xff]
    %v20 = vld [vmem:[%s1] sm:$0xff]
    %v21 = vld [vmem:[%s1 + $0x8] sm:$0xff]
    %v22 = vsub.f32 %v18, %v20
    %v23 = vsub.f32 %v19, %v21
    %v24 = vmul.f32 %v22, %v22
    %v25 = vmul.f32 %v23, %v23
    %v26 = vld [vmem:[#allocation2] sm:$0xff]
    %v27 = vld [vmem:[#allocation2 + $0x8] sm:$0xff]
    %v28 = vadd.f32 %v26, %v24
    %v29 = vadd.f32 %v27, %v25
    %30 = vst [vmem:[#allocation2] sm:$0xff] %v28
    %31 = vst [vmem:[#allocation2 + $0x8] sm:$0xff] %v29
    // Predicated region
    $region14: #{_mse_loss_pallas.1} parent=1 // pred_check
      %p32 = pneg %p12
    $region15: #{_mse_loss_pallas.1} parent=1 // pred_check_branch
      %34 = sbr.rel (%p32) target = $region17
    $region16: #{_mse_loss_pallas.1} parent=1 // pred_region
      %v35 = vld [vmem:[#allocation2] sm:$0xff]
      %v36 = vld [vmem:[#allocation2 + $0x8] sm:$0xff]
      %v37 = vadd.f32 %v35, %v36
      %38 = vadd.xlane.f32.xlu0 %v37
      %v39 = vpop.xlane.xlu0 %38
      %v40 = vrot.slane %v39, 4
      %v41 = vadd.f32 %v39, %v40
      %v42 = vrot.slane %v41, 2
      %v43 = vadd.f32 %v41, %v42
      %v44 = vrot.slane %v43, 1
      %v45 = vadd.f32 %v43, %v44
      %s46 = vtos %v45
      %s47 = smul.f32 %s46, 0.00048828125
      %s48 = scalar_lea.smem [#allocation3], 0
      %49 = sst [smem:[%s48]] %s47
    $region17: #{_mse_loss_pallas.1} parent=1 // pred_fallthru
      _
    // Predicated region
    $region18: #{_mse_loss_pallas.1} parent=1 // pred_check
      _
    $region19: #{_mse_loss_pallas.1} parent=1 // pred_check_branch
      %51 = sbr.rel (0) target = $region21
    $region20: #{_mse_loss_pallas.1} parent=1 // pred_region
      %s53 = ssub.s32 16, 16
      %54 = vsyncadd [#allocation4], %s53
      %57 = dma.smem_to_hbm [#allocation3], 16, %s2, [#allocation4]
    $region21: #{_mse_loss_pallas.1} parent=1 // pred_fallthru
      _
    // Predicated region
    $region22: #{_mse_loss_pallas.1} parent=1 // pred_check
      _
    $region23: #{_mse_loss_pallas.1} parent=1 // pred_check_branch
      %59 = sbr.rel (0) target = $region25
    $region24: #{_mse_loss_pallas.1} parent=1 // pred_region
      %60 = dma.done [#allocation4], 16
    $region25: #{_mse_loss_pallas.1} parent=1 // pred_fallthru
      _
    %61 = sfence
    %62 = vsyncpa [#allocation4], 1

</llo_original>
